<compile_context>
chip_gen: v6e
topology: v6e:2x2x1
jax: 0.10.0
libtpu: 0.0.40
codegen_flags: <defaults>
</compile_context>

<pallas_src>
import functools

import jax
import jax.numpy as jnp
from jax.experimental import pallas as pl
from jax.experimental.pallas import tpu as pltpu


def _attn_gated_kernel(x_ref, wab_ref, bab_ref, wct_ref, bct_ref, At_ref):
    D = wct_ref.shape[1]

    x = x_ref[...]                                   # (TN, L), native dtype

    # Fused attention_a / attention_b projection: one MXU dot, f32 accumulate.
    ab = jnp.dot(x, wab_ref[...], preferred_element_type=jnp.float32)
    ab = ab + bab_ref[...]                           # (TN, 2D), f32

    a = jnp.tanh(ab[:, :D])                          # EUP
    b = jax.nn.sigmoid(ab[:, D:])                    # EUP
    gated = a * b                                    # VPU, f32

    # attention_c, emitted pre-transposed so the (C, TN) store is lane-dense.
    gated_t = gated.T.astype(wct_ref.dtype)          # (D, TN) XLU transpose
    At = jnp.dot(wct_ref[...], gated_t, preferred_element_type=jnp.float32)
    At = At + bct_ref[...]                           # (C, TN) + (C, 1)

    At_ref[...] = At.astype(At_ref.dtype)


def attn_net_gated(x, wa, ba, wb, bb, wc, bc, *, block_n=512, interpret=False):
    """Gated attention forward. Returns (A, x) like the nn.Module.

    Weights are stored pre-transposed ([in_features, out_features]) so the
    kernel computes plain x @ W + b on the MXU.
    """
    N, L = x.shape
    D = wa.shape[1]
    C = wc.shape[1]

    # Trace-time weight fusion: one [L, 2D] projection instead of two [L, D].
    wab = jnp.concatenate([wa, wb], axis=1)              # [L, 2D]
    bab = jnp.concatenate([ba, bb]).reshape(1, 2 * D)    # [1, 2D]
    wct = wc.T                                           # [C, D]
    bct = bc.reshape(C, 1)                               # [C, 1]

    # Tile the instance axis. Keep the tile a multiple of 128 (lane-dense
    # transposed output block) unless one tile covers all of N.
    tn = min(block_n, N)
    if tn < N:
        tn = max(128, (tn // 128) * 128)
    grid = (pl.cdiv(N, tn),)

    # VMEM sizing note: at the real module shapes (L=1024, D=256, f32) and the
    # default block_n=512 the footprint is ~4 MiB of double-buffered x tiles
    # + ~2 MiB resident weights + ~2 MiB activations: comfortably inside
    # v5e's 16 MiB default scoped VMEM and far under v7x's 64 MiB physical
    # VMEM. With bf16 inputs block_n can be doubled.
    At = pl.pallas_call(
        _attn_gated_kernel,
        out_shape=jax.ShapeDtypeStruct((C, N), x.dtype),
        grid=grid,
        in_specs=[
            pl.BlockSpec((tn, L), lambda i: (i, 0)),       # streamed x tile
            pl.BlockSpec((L, 2 * D), lambda i: (0, 0)),    # resident weights
            pl.BlockSpec((1, 2 * D), lambda i: (0, 0)),
            pl.BlockSpec((C, D), lambda i: (0, 0)),
            pl.BlockSpec((C, 1), lambda i: (0, 0)),
        ],
        out_specs=pl.BlockSpec((C, tn), lambda i: (0, i)),
        compiler_params=pltpu.CompilerParams(
            # Independent tiles: let the grid shard across TCs (v7x megacore).
            dimension_semantics=("parallel",),
        ),
        interpret=interpret,
    )(x, wab, bab, wct, bct)

    A = At.T  # back to [N, C] like the PyTorch module
    return A, x


def init_params(key, L, D, n_classes, dtype=jnp.float32):
    """Deterministic synthetic init (PyTorch Linear shapes, stored transposed)."""
    k = jax.random.split(key, 6)
    # nn.Linear(L, D).weight is [D, L]; we keep W^T = [L, D] for the kernel.
    wa = jax.random.normal(k[0], (L, D), dtype) * 0.02
    ba = jax.random.normal(k[1], (D,), dtype) * 0.02
    wb = jax.random.normal(k[2], (L, D), dtype) * 0.02
    bb = jax.random.normal(k[3], (D,), dtype) * 0.02
    wc = jax.random.normal(k[4], (D, n_classes), dtype) * 0.02
    bc = jax.random.normal(k[5], (n_classes,), dtype) * 0.02
    return wa, ba, wb, bb, wc, bc


def reference(x, wa, ba, wb, bb, wc, bc):
    a = jnp.tanh(x @ wa + ba)
    b = jax.nn.sigmoid(x @ wb + bb)
    return (a * b) @ wc + bc


if __name__ == "__main__":
    # Small shapes consistent with the module (L=1024, D=256 scaled down),
    # kept lane friendly: D multiple of 128 so the tanh/sigmoid column split
    # lands on vreg boundaries.
    N, L, D, n_classes = 256, 256, 128, 1

    key = jax.random.PRNGKey(0)
    kx, kp = jax.random.split(key)
    x = jax.random.normal(kx, (N, L), jnp.float32)
    params = init_params(kp, L, D, n_classes)

    # block_n=128 -> grid of 2 tiles, exercising the pipelined path.
    fwd = jax.jit(functools.partial(attn_net_gated, block_n=128))

    A, x_out = fwd(x, *params)
    jax.block_until_ready((A, x_out))

    # f32 sanity check against a pure-JAX reference.
    A_ref = reference(x, *params)
    assert A.shape == (N, n_classes)
    assert x_out.shape == x.shape
    assert jnp.allclose(A, A_ref, atol=2e-3, rtol=2e-2), float(
        jnp.max(jnp.abs(A - A_ref)))
    assert jnp.array_equal(x_out, x)

    # bf16 path (recommended on v6e/v7x): bf16 MXU inputs, f32 accumulation.
    x_bf = x.astype(jnp.bfloat16)
    params_bf = tuple(p.astype(jnp.bfloat16) for p in params)
    A_bf, x_bf_out = fwd(x_bf, *params_bf)
    jax.block_until_ready((A_bf, x_bf_out))
    A_bf_ref = reference(x_bf.astype(jnp.float32),
                         *[p.astype(jnp.float32) for p in params_bf])
    assert A_bf.shape == (N, n_classes)
    assert jnp.allclose(A_bf.astype(jnp.float32), A_bf_ref, atol=3e-3, rtol=3e-2)

    print("KERNEL_OK")
</pallas_src>

<mosaic_0001>
module attributes {stable_mosaic.version = 11 : i64} {
  func.func @_attn_gated_kernel(%arg0: i32, %arg1: memref<128x256xf32, #tpu.memory_space<vmem>>, %arg2: memref<256x256xf32, #tpu.memory_space<vmem>>, %arg3: memref<1x256xf32, #tpu.memory_space<vmem>>, %arg4: memref<1x128xf32, #tpu.memory_space<vmem>>, %arg5: memref<1x1xf32, #tpu.memory_space<vmem>>, %arg6: memref<1x128xf32, #tpu.memory_space<vmem>>) attributes {dimension_semantics = [#tpu.dimension_semantics<parallel>], iteration_bounds = array<i64: 2>, scalar_prefetch = 0 : i64, scratch_operands = 0 : i64, tpu.core_type = #tpu.core_type<tc>, window_params = [{transform_indices = @transform_0, window_bounds = array<i64: 128, 256>}, {pipeline_mode = #tpu.pipeline_mode<synchronous>, transform_indices = @transform_1, window_bounds = array<i64: 256, 256>}, {pipeline_mode = #tpu.pipeline_mode<synchronous>, transform_indices = @transform_2, window_bounds = array<i64: 1, 256>}, {pipeline_mode = #tpu.pipeline_mode<synchronous>, transform_indices = @transform_3, window_bounds = array<i64: 1, 128>}, {pipeline_mode = #tpu.pipeline_mode<synchronous>, transform_indices = @transform_4, window_bounds = array<i64: 1, 1>}, {transform_indices = @transform_5, window_bounds = array<i64: 1, 128>}]} {
    %c0 = arith.constant 0 : index
    %c0_0 = arith.constant 0 : index
    %0 = vector.load %arg1[%c0, %c0_0] : memref<128x256xf32, #tpu.memory_space<vmem>>, vector<128x256xf32>
    %c0_1 = arith.constant 0 : index
    %c0_2 = arith.constant 0 : index
    %1 = vector.load %arg2[%c0_1, %c0_2] : memref<256x256xf32, #tpu.memory_space<vmem>>, vector<256x256xf32>
    %cst = arith.constant dense<0.000000e+00> : vector<128x256xf32>
    %2 = tpu.matmul %0, %1, %cst {dimension_numbers = #tpu.dot_dimension_numbers<[1], [0], [0], [1], [0, 0, 1, 1], [], []>} : vector<128x256xf32>, vector<256x256xf32>, vector<128x256xf32> -> vector<128x256xf32>
    %c0_3 = arith.constant 0 : index
    %c0_4 = arith.constant 0 : index
    %3 = vector.load %arg3[%c0_3, %c0_4] : memref<1x256xf32, #tpu.memory_space<vmem>>, vector<1x256xf32>
    %4 = vector.broadcast %3 : vector<1x256xf32> to vector<128x256xf32>
    %5 = arith.addf %2, %4 : vector<128x256xf32>
    %6 = vector.extract_strided_slice %5 {offsets = [0, 0], sizes = [128, 128], strides = [1, 1]} : vector<128x256xf32> to vector<128x128xf32>
    %7 = math.tanh %6 : vector<128x128xf32>
    %8 = vector.extract_strided_slice %5 {offsets = [0, 128], sizes = [128, 128], strides = [1, 1]} : vector<128x256xf32> to vector<128x128xf32>
    %9 = arith.negf %8 : vector<128x128xf32>
    %10 = math.exp %9 : vector<128x128xf32>
    %cst_5 = arith.constant 1.000000e+00 : f32
    %11 = vector.broadcast %cst_5 : f32 to vector<128x128xf32>
    %12 = arith.addf %11, %10 : vector<128x128xf32>
    %13 = arith.divf %11, %12 : vector<128x128xf32>
    %14 = arith.mulf %7, %13 : vector<128x128xf32>
    %15 = tpu.transpose %14, [1, 0] : vector<128x128xf32> -> vector<128x128xf32>
    %c0_6 = arith.constant 0 : index
    %c0_7 = arith.constant 0 : index
    %16 = vector.load %arg4[%c0_6, %c0_7] : memref<1x128xf32, #tpu.memory_space<vmem>>, vector<1x128xf32>
    %cst_8 = arith.constant dense<0.000000e+00> : vector<1x128xf32>
    %17 = tpu.matmul %16, %15, %cst_8 {dimension_numbers = #tpu.dot_dimension_numbers<[1], [0], [0], [1], [0, 0, 1, 1], [], []>} : vector<1x128xf32>, vector<128x128xf32>, vector<1x128xf32> -> vector<1x128xf32>
    %c0_9 = arith.constant 0 : index
    %c0_10 = arith.constant 0 : index
    %18 = vector.load %arg5[%c0_9, %c0_10] : memref<1x1xf32, #tpu.memory_space<vmem>>, vector<1x1xf32>
    %19 = vector.broadcast %18 : vector<1x1xf32> to vector<1x128xf32>
    %20 = arith.addf %17, %19 : vector<1x128xf32>
    %c0_11 = arith.constant 0 : index
    %c0_12 = arith.constant 0 : index
    %21 = vector.load %arg6[%c0_11, %c0_12] : memref<1x128xf32, #tpu.memory_space<vmem>>, vector<1x128xf32>
    tpu.vector_store %arg6[%c0_11, %c0_12], %20 {strides = array<i32>} : memref<1x128xf32, #tpu.memory_space<vmem>>, vector<1x128xf32>,
    return
  }
  func.func @transform_0(%arg0: i32) -> (i32, i32) {
    %c0_i32 = arith.constant 0 : i32
    %c0_i32_0 = arith.constant 0 : i32
    return %arg0, %c0_i32 : i32, i32
  }
  func.func @transform_1(%arg0: i32) -> (i32, i32) {
    %c0_i32 = arith.constant 0 : i32
    %c0_i32_0 = arith.constant 0 : i32
    %c0_i32_1 = arith.constant 0 : i32
    return %c0_i32, %c0_i32_0 : i32, i32
  }
  func.func @transform_2(%arg0: i32) -> (i32, i32) {
    %c0_i32 = arith.constant 0 : i32
    %c0_i32_0 = arith.constant 0 : i32
    %c0_i32_1 = arith.constant 0 : i32
    return %c0_i32, %c0_i32_0 : i32, i32
  }
  func.func @transform_3(%arg0: i32) -> (i32, i32) {
    %c0_i32 = arith.constant 0 : i32
    %c0_i32_0 = arith.constant 0 : i32
    %c0_i32_1 = arith.constant 0 : i32
    return %c0_i32, %c0_i32_0 : i32, i32
  }
  func.func @transform_4(%arg0: i32) -> (i32, i32) {
    %c0_i32 = arith.constant 0 : i32
    %c0_i32_0 = arith.constant 0 : i32
    %c0_i32_1 = arith.constant 0 : i32
    return %c0_i32, %c0_i32_0 : i32, i32
  }
  func.func @transform_5(%arg0: i32) -> (i32, i32) {
    %c0_i32 = arith.constant 0 : i32
    %c0_i32_0 = arith.constant 0 : i32
    return %c0_i32, %arg0 : i32, i32
  }
}

</mosaic_0001>

<llo_original>
// kernel: attn_net_gated.1
$region0: #{attn_net_gated.1}
  #allocation0 [shape = 'u32[]', space=smem, size = 0x4, offset = 0x4, fixed_abs, tag = 'smem constant byte address 0x4 - core index']
  #allocation1 [shape = 'u32[144,128]{1,0:T(1,128)}', space=vmem, size = 0x12000, scoped, tag = 'internal scratch']
  #allocation2 [shape = 'f32[1,1]{1,0:T(1,128)S(1)}', space=vmem, size = 0x200, scoped, tag = 'scoped memory for attn_net_gated.1']
  %s0 = inlined_call_operand.vmem [shape: f32[256,256], index: 0, kind: input, shape index: {}]
  %s1 = inlined_call_operand.vmem [shape: f32[256,256], index: 1, kind: input, shape index: {}]
  %s2 = inlined_call_operand.vmem [shape: f32[1,256], index: 2, kind: input, shape index: {}]
  %s3 = inlined_call_operand.vmem [shape: f32[1,128], index: 3, kind: input, shape index: {}]
  %s4 = inlined_call_operand.<no memory space> [shape: f32[1,1], index: 4, kind: input, shape index: {}]
  %s5 = inlined_call_operand.hbm [shape: f32[1,256], index: 5, kind: output, shape index: {}]
  %s6 = sld [smem:[#allocation0]]
  $region53: #{attn_net_gated.1} parent=0
    _
  %s8 = ssub.s32 1, %s6
  %s9 = scalar_select 0, %s8, %s6
  %v10 = vstv %s4
  %11 = vst [vmem:[#allocation2] sm:$0x1] %v10
  $region1: #{attn_net_gated.1} parent=0
    #allocation3 [shape = 'u8[1024]{0}', space=vmem, size = 0x400, scoped, tag = 'output window, operand 0']
    #allocation4 [shape = 's32[2]{0}', space=sflag, size = 0x8, scoped, tag = 'scoped memory for attn_net_gated.1']
    %12 = vsyncpa [#allocation4], 0
    %s13 = scalar_lea.sflag [#allocation4], 1
    %14 = vsyncpa %s13, 0
    loop: start=0, step=1, limit=4
    $region2: #{attn_net_gated.1} parent=1 // loop_pre_header
      _
    $region3: #{attn_net_gated.1} parent=1 // loop_header
      %s16 = sphi 0, %s20
      %p17 = scmp.ge.s32.totalorder %s16, 4
      %s26 = sphi 0, %s28
      %s29 = sphi 0, %s26
      %s30 = sphi 0, %s29
      %s46 = sphi 0, %s30
      %s50 = sphi 0, %s50
      %s52 = sphi 0, %s50
      %s53 = sphi 0, %s52
      %s67 = sphi 0, %s53
      %s71 = sphi 0, %s71
      %s73 = sphi 0, %s71
      %s74 = sphi 0, %s73
      %s88 = sphi 0, %s74
      %s92 = sphi 0, %s92
      %s94 = sphi 0, %s92
      %s95 = sphi 0, %s94
      %s109 = sphi 0, %s95
      %s113 = sphi 0, %s113
      %s115 = sphi 0, %s113
      %s116 = sphi 0, %s115
      %s130 = sphi 0, %s116
      %s136 = sphi 0, %s138
      %s139 = sphi 0, %s136
      %s140 = sphi 0, %s139
      %s156 = sphi 0, %s140
    $region4: #{attn_net_gated.1} parent=1 // loop_header_branch
      %19 = sbr.rel (%p17) target = $region8
    $region5: #{attn_net_gated.1} parent=1 // loop_body
      %s21 = ssub.s32 %s16, 1
      %s22 = ssub.s32 %s16, 2
      %s23 = sadd.s32 %s16, 1
      %s24 = ssub.s32 %s16, %s23
      %p25 = scmp.eq.s32.totalorder %s24, 0
      %s27 = sadd.s32 %s26, 1
      %s28 = scalar_select %p25, %s26, %s27
      %p31 = pneg %p25
      %p32 = scmp.eq.s32.totalorder %s16, 1
      %p33 = por %p31, %p32
      %p34 = scmp.ne.s32.totalorder %s26, %s29
      %p35 = scmp.eq.s32.totalorder %s16, 0
      %p36 = por %p34, %p35
      %p37 = scmp.ne.s32.totalorder %s26, %s29
      %p38 = scmp.eq.s32.totalorder %s21, 1
      %p39 = por %p37, %p38
      %p40 = scmp.ne.s32.totalorder %s29, %s30
      %p41 = scmp.eq.s32.totalorder %s21, 0
      %p42 = por %p40, %p41
      %p43 = scmp.ne.s32.totalorder %s29, %s30
      %p44 = scmp.eq.s32.totalorder %s22, 1
      %p45 = por %p43, %p44
      %p47 = scmp.ne.s32.totalorder %s30, %s46
      %p48 = scmp.eq.s32.totalorder %s22, 0
      %p49 = por %p47, %p48
      %s51 = sadd.s32 %s50, 1
      %p54 = scmp.eq.s32.totalorder %s16, 1
      %p55 = scmp.ne.s32.totalorder %s50, %s52
      %p56 = scmp.eq.s32.totalorder %s16, 0
      %p57 = por %p55, %p56
      %p58 = scmp.ne.s32.totalorder %s50, %s52
      %p59 = scmp.eq.s32.totalorder %s21, 1
      %p60 = por %p58, %p59
      %p61 = scmp.ne.s32.totalorder %s52, %s53
      %p62 = scmp.eq.s32.totalorder %s21, 0
      %p63 = por %p61, %p62
      %p64 = scmp.ne.s32.totalorder %s52, %s53
      %p65 = scmp.eq.s32.totalorder %s22, 1
      %p66 = por %p64, %p65
      %p68 = scmp.ne.s32.totalorder %s53, %s67
      %p69 = scmp.eq.s32.totalorder %s22, 0
      %p70 = por %p68, %p69
      %s72 = sadd.s32 %s71, 1
      %p75 = scmp.eq.s32.totalorder %s16, 1
      %p76 = scmp.ne.s32.totalorder %s71, %s73
      %p77 = scmp.eq.s32.totalorder %s16, 0
      %p78 = por %p76, %p77
      %p79 = scmp.ne.s32.totalorder %s71, %s73
      %p80 = scmp.eq.s32.totalorder %s21, 1
      %p81 = por %p79, %p80
      %p82 = scmp.ne.s32.totalorder %s73, %s74
      %p83 = scmp.eq.s32.totalorder %s21, 0
      %p84 = por %p82, %p83
      %p85 = scmp.ne.s32.totalorder %s73, %s74
      %p86 = scmp.eq.s32.totalorder %s22, 1
      %p87 = por %p85, %p86
      %p89 = scmp.ne.s32.totalorder %s74, %s88
      %p90 = scmp.eq.s32.totalorder %s22, 0
      %p91 = por %p89, %p90
      %s93 = sadd.s32 %s92, 1
      %p96 = scmp.eq.s32.totalorder %s16, 1
      %p97 = scmp.ne.s32.totalorder %s92, %s94
      %p98 = scmp.eq.s32.totalorder %s16, 0
      %p99 = por %p97, %p98
      %p100 = scmp.ne.s32.totalorder %s92, %s94
      %p101 = scmp.eq.s32.totalorder %s21, 1
      %p102 = por %p100, %p101
      %p103 = scmp.ne.s32.totalorder %s94, %s95
      %p104 = scmp.eq.s32.totalorder %s21, 0
      %p105 = por %p103, %p104
      %p106 = scmp.ne.s32.totalorder %s94, %s95
      %p107 = scmp.eq.s32.totalorder %s22, 1
      %p108 = por %p106, %p107
      %p110 = scmp.ne.s32.totalorder %s95, %s109
      %p111 = scmp.eq.s32.totalorder %s22, 0
      %p112 = por %p110, %p111
      %s114 = sadd.s32 %s113, 1
      %p117 = scmp.eq.s32.totalorder %s16, 1
      %p118 = scmp.ne.s32.totalorder %s113, %s115
      %p119 = scmp.eq.s32.totalorder %s16, 0
      %p120 = por %p118, %p119
      %p121 = scmp.ne.s32.totalorder %s113, %s115
      %p122 = scmp.eq.s32.totalorder %s21, 1
      %p123 = por %p121, %p122
      %p124 = scmp.ne.s32.totalorder %s115, %s116
      %p125 = scmp.eq.s32.totalorder %s21, 0
      %p126 = por %p124, %p125
      %p127 = scmp.ne.s32.totalorder %s115, %s116
      %p128 = scmp.eq.s32.totalorder %s22, 1
      %p129 = por %p127, %p128
      %p131 = scmp.ne.s32.totalorder %s116, %s130
      %p132 = scmp.eq.s32.totalorder %s22, 0
      %p133 = por %p131, %p132
      %s134 = ssub.s32 %s16, %s23
      %p135 = scmp.eq.s32.totalorder %s134, 0
      %s137 = sadd.s32 %s136, 1
      %s138 = scalar_select %p135, %s136, %s137
      %p141 = pneg %p135
      %p142 = scmp.eq.s32.totalorder %s16, 1
      %p143 = por %p141, %p142
      %p144 = scmp.ne.s32.totalorder %s136, %s139
      %p145 = scmp.eq.s32.totalorder %s16, 0
      %p146 = por %p144, %p145
      %p147 = scmp.ne.s32.totalorder %s136, %s139
      %p148 = scmp.eq.s32.totalorder %s21, 1
      %p149 = por %p147, %p148
      %p150 = scmp.ne.s32.totalorder %s139, %s140
      %p151 = scmp.eq.s32.totalorder %s21, 0
      %p152 = por %p150, %p151
      %p153 = scmp.ne.s32.totalorder %s139, %s140
      %p154 = scmp.eq.s32.totalorder %s22, 1
      %p155 = por %p153, %p154
      %p157 = scmp.ne.s32.totalorder %s140, %s156
      %p158 = scmp.eq.s32.totalorder %s22, 0
      %p159 = por %p157, %p158
      %p160 = scmp.le.s32.totalorder 1, %s16
      %p161 = scmp.lt.s32.totalorder %s16, 3
      %p162 = pnand %p160, %p161
      %p163 = pneg %p162
      // Predicated region
      $region9: #{attn_net_gated.1} parent=5 // pred_check
        _
      $region10: #{attn_net_gated.1} parent=5 // pred_check_branch
        %165 = sbr.rel (%p162) target = $region12
      $region11: #{attn_net_gated.1} parent=5 // pred_region
        %s166 = ssub.s32 %s16, 1
        // Predicated region
        $region13: #{attn_net_gated.1} parent=11 // pred_check
          %p167 = pneg %p63
        $region14: #{attn_net_gated.1} parent=11 // pred_check_branch
          %169 = sbr.rel (%p167) target = $region16
        $region15: #{attn_net_gated.1} parent=11 // pred_region
          _
        $region16: #{attn_net_gated.1} parent=11 // pred_fallthru
          _
        // Predicated region
        $region17: #{attn_net_gated.1} parent=11 // pred_check
          %p170 = pneg %p84
        $region18: #{attn_net_gated.1} parent=11 // pred_check_branch
          %172 = sbr.rel (%p170) target = $region20
        $region19: #{attn_net_gated.1} parent=11 // pred_region
          _
        $region20: #{attn_net_gated.1} parent=11 // pred_fallthru
          _
        // Predicated region
        $region21: #{attn_net_gated.1} parent=11 // pred_check
          %p173 = pneg %p105
        $region22: #{attn_net_gated.1} parent=11 // pred_check_branch
          %175 = sbr.rel (%p173) target = $region24
        $region23: #{attn_net_gated.1} parent=11 // pred_region
          _
        $region24: #{attn_net_gated.1} parent=11 // pred_fallthru
          _
        // Predicated region
        $region25: #{attn_net_gated.1} parent=11 // pred_check
          %p176 = pneg %p126
        $region26: #{attn_net_gated.1} parent=11 // pred_check_branch
          %178 = sbr.rel (%p176) target = $region28
        $region27: #{attn_net_gated.1} parent=11 // pred_region
          _
        $region28: #{attn_net_gated.1} parent=11 // pred_fallthru
          _
      $region12: #{attn_net_gated.1} parent=5 // pred_fallthru
        _
      %p179 = scmp.lt.s32.totalorder %s16, 2
      // Predicated region
      $region29: #{attn_net_gated.1} parent=5 // pred_check
        %p180 = pneg %p179
      $region30: #{attn_net_gated.1} parent=5 // pred_check_branch
        %182 = sbr.rel (%p180) target = $region32
      $region31: #{attn_net_gated.1} parent=5 // pred_region
        // Predicated region
        $region33: #{attn_net_gated.1} parent=31 // pred_check
          %p183 = pneg %p36
        $region34: #{attn_net_gated.1} parent=31 // pred_check_branch
          %185 = sbr.rel (%p183) target = $region36
        $region35: #{attn_net_gated.1} parent=31 // pred_region
          %s186 = smul.u32 16, %s16
          %p187 = scmp.lt.s32.totalorder %s186, 31
          %s188 = scalar_select %p187, %s186, 31
          %s189 = smul.addr %s188, 2
          %s190 = smul.addr %s189, 8
          %s191 = scalar_lea.vmem %s0, %s190
          %s192 = smul.u32 16, %s16
        $region36: #{attn_net_gated.1} parent=31 // pred_fallthru
          _
      $region32: #{attn_net_gated.1} parent=5 // pred_fallthru
        _
      %p193 = scmp.le.s32.totalorder 1, %s16
      %p194 = scmp.lt.s32.totalorder %s16, 3
      %p195 = pnand %p193, %p194
      %p196 = pneg %p195
      // Predicated region
      $region37: #{attn_net_gated.1} parent=5 // pred_check
        _
      $region38: #{attn_net_gated.1} parent=5 // pred_check_branch
        %198 = sbr.rel (%p195) target = $region40
      $region39: #{attn_net_gated.1} parent=5 // pred_region
        %s199 = ssub.s32 %s16, 1
        %s200 = smul.u32 16, %s21
        %p201 = scmp.lt.s32.totalorder %s200, 31
        %s202 = scalar_select %p201, %s200, 31
        %s203 = smul.addr %s202, 2
        %s204 = smul.addr %s203, 8
        %s205 = scalar_lea.vmem %s0, %s204
        %p206 = pneg %p42
        %p207 = pneg %p39
        %p208 = pneg %p63
        %p209 = pneg %p60
        %p210 = pneg %p84
        %p211 = pneg %p81
        %p212 = pneg %p105
        %p213 = pneg %p102
        %p214 = pneg %p126
        %p215 = pneg %p123
        %p216 = pneg %p152
        %p217 = pneg %p149
        %s218 = sand.u32 %s139, 1
        %s219 = scalar_lea.sflag [#allocation4], %s218
        %s220 = sand.u32 %s139, 1
        %s221 = scalar_lea.vmem [#allocation3], %s220
        %s222 = smul.u32 16, %s21
        %p223 = scmp.lt.s32.totalorder %s222, 31
        %s224 = scalar_select %p223, %s222, 31
        %s225 = smul.addr %s224, 2
        %s226 = smul.addr %s225, 8
        %s227 = scalar_lea.vmem %s0, %s226
        %s228 = smul.u32 16, %s21
        %v229 = vld [vmem:[%s227] sm:$0xff]
        %v230 = vld [vmem:[%s227 + $0x8] sm:$0xff]
        %v231 = vld [vmem:[%s227 + $0x10] sm:$0xff]
        %v232 = vld [vmem:[%s227 + $0x18] sm:$0xff]
        %v233 = vld [vmem:[%s227 + $0x20] sm:$0xff]
        %v234 = vld [vmem:[%s227 + $0x28] sm:$0xff]
        %v235 = vld [vmem:[%s227 + $0x30] sm:$0xff]
        %v236 = vld [vmem:[%s227 + $0x38] sm:$0xff]
        %v237 = vld [vmem:[%s227 + $0x40] sm:$0xff]
        %v238 = vld [vmem:[%s227 + $0x48] sm:$0xff]
        %v239 = vld [vmem:[%s227 + $0x50] sm:$0xff]
        %v240 = vld [vmem:[%s227 + $0x58] sm:$0xff]
        %v241 = vld [vmem:[%s227 + $0x60] sm:$0xff]
        %v242 = vld [vmem:[%s227 + $0x68] sm:$0xff]
        %v243 = vld [vmem:[%s227 + $0x70] sm:$0xff]
        %v244 = vld [vmem:[%s227 + $0x78] sm:$0xff]
        %v245 = vld [vmem:[%s227 + $0x80] sm:$0xff]
        %v246 = vld [vmem:[%s227 + $0x88] sm:$0xff]
        %v247 = vld [vmem:[%s227 + $0x90] sm:$0xff]
        %v248 = vld [vmem:[%s227 + $0x98] sm:$0xff]
        %v249 = vld [vmem:[%s227 + $0xa0] sm:$0xff]
        %v250 = vld [vmem:[%s227 + $0xa8] sm:$0xff]
        %v251 = vld [vmem:[%s227 + $0xb0] sm:$0xff]
        %v252 = vld [vmem:[%s227 + $0xb8] sm:$0xff]
        %v253 = vld [vmem:[%s227 + $0xc0] sm:$0xff]
        %v254 = vld [vmem:[%s227 + $0xc8] sm:$0xff]
        %v255 = vld [vmem:[%s227 + $0xd0] sm:$0xff]
        %v256 = vld [vmem:[%s227 + $0xd8] sm:$0xff]
        %v257 = vld [vmem:[%s227 + $0xe0] sm:$0xff]
        %v258 = vld [vmem:[%s227 + $0xe8] sm:$0xff]
        %v259 = vld [vmem:[%s227 + $0xf0] sm:$0xff]
        %v260 = vld [vmem:[%s227 + $0xf8] sm:$0xff]
        %v261 = vld [vmem:[%s1] sm:$0xff]
        %v262 = vld [vmem:[%s1 + $0x8] sm:$0xff]
        %v263 = vld [vmem:[%s1 + $0x10] sm:$0xff]
        %v264 = vld [vmem:[%s1 + $0x18] sm:$0xff]
        %v265 = vld [vmem:[%s1 + $0x20] sm:$0xff]
        %v266 = vld [vmem:[%s1 + $0x28] sm:$0xff]
        %v267 = vld [vmem:[%s1 + $0x30] sm:$0xff]
        %v268 = vld [vmem:[%s1 + $0x38] sm:$0xff]
        %v269 = vld [vmem:[%s1 + $0x40] sm:$0xff]
        %v270 = vld [vmem:[%s1 + $0x48] sm:$0xff]
        %v271 = vld [vmem:[%s1 + $0x50] sm:$0xff]
        %v272 = vld [vmem:[%s1 + $0x58] sm:$0xff]
        %v273 = vld [vmem:[%s1 + $0x60] sm:$0xff]
        %v274 = vld [vmem:[%s1 + $0x68] sm:$0xff]
        %v275 = vld [vmem:[%s1 + $0x70] sm:$0xff]
        %v276 = vld [vmem:[%s1 + $0x78] sm:$0xff]
        %v277 = vld [vmem:[%s1 + $0x80] sm:$0xff]
        %v278 = vld [vmem:[%s1 + $0x88] sm:$0xff]
        %v279 = vld [vmem:[%s1 + $0x90] sm:$0xff]
        %v280 = vld [vmem:[%s1 + $0x98] sm:$0xff]
        %v281 = vld [vmem:[%s1 + $0xa0] sm:$0xff]
        %v282 = vld [vmem:[%s1 + $0xa8] sm:$0xff]
        %v283 = vld [vmem:[%s1 + $0xb0] sm:$0xff]
        %v284 = vld [vmem:[%s1 + $0xb8] sm:$0xff]
        %v285 = vld [vmem:[%s1 + $0xc0] sm:$0xff]
        %v286 = vld [vmem:[%s1 + $0xc8] sm:$0xff]
        %v287 = vld [vmem:[%s1 + $0xd0] sm:$0xff]
        %v288 = vld [vmem:[%s1 + $0xd8] sm:$0xff]
        %v289 = vld [vmem:[%s1 + $0xe0] sm:$0xff]
        %v290 = vld [vmem:[%s1 + $0xe8] sm:$0xff]
        %v291 = vld [vmem:[%s1 + $0xf0] sm:$0xff]
        %v292 = vld [vmem:[%s1 + $0xf8] sm:$0xff]
        %v293 = vld [vmem:[%s1 + $0x100] sm:$0xff]
        %v294 = vld [vmem:[%s1 + $0x108] sm:$0xff]
        %v295 = vld [vmem:[%s1 + $0x110] sm:$0xff]
        %v296 = vld [vmem:[%s1 + $0x118] sm:$0xff]
        %v297 = vld [vmem:[%s1 + $0x120] sm:$0xff]
        %v298 = vld [vmem:[%s1 + $0x128] sm:$0xff]
        %v299 = vld [vmem:[%s1 + $0x130] sm:$0xff]
        %v300 = vld [vmem:[%s1 + $0x138] sm:$0xff]
        %v301 = vld [vmem:[%s1 + $0x140] sm:$0xff]
        %v302 = vld [vmem:[%s1 + $0x148] sm:$0xff]
        %v303 = vld [vmem:[%s1 + $0x150] sm:$0xff]
        %v304 = vld [vmem:[%s1 + $0x158] sm:$0xff]
        %v305 = vld [vmem:[%s1 + $0x160] sm:$0xff]
        %v306 = vld [vmem:[%s1 + $0x168] sm:$0xff]
        %v307 = vld [vmem:[%s1 + $0x170] sm:$0xff]
        %v308 = vld [vmem:[%s1 + $0x178] sm:$0xff]
        %v309 = vld [vmem:[%s1 + $0x180] sm:$0xff]
        %v310 = vld [vmem:[%s1 + $0x188] sm:$0xff]
        %v311 = vld [vmem:[%s1 + $0x190] sm:$0xff]
        %v312 = vld [vmem:[%s1 + $0x198] sm:$0xff]
        %v313 = vld [vmem:[%s1 + $0x1a0] sm:$0xff]
        %v314 = vld [vmem:[%s1 + $0x1a8] sm:$0xff]
        %v315 = vld [vmem:[%s1 + $0x1b0] sm:$0xff]
        %v316 = vld [vmem:[%s1 + $0x1b8] sm:$0xff]
        %v317 = vld [vmem:[%s1 + $0x1c0] sm:$0xff]
        %v318 = vld [vmem:[%s1 + $0x1c8] sm:$0xff]
        %v319 = vld [vmem:[%s1 + $0x1d0] sm:$0xff]
        %v320 = vld [vmem:[%s1 + $0x1d8] sm:$0xff]
        %v321 = vld [vmem:[%s1 + $0x1e0] sm:$0xff]
        %v322 = vld [vmem:[%s1 + $0x1e8] sm:$0xff]
        %v323 = vld [vmem:[%s1 + $0x1f0] sm:$0xff]
        %v324 = vld [vmem:[%s1 + $0x1f8] sm:$0xff]
        %v325 = vld [vmem:[%s2] sm:$0x3]
        %v327 = vlaneseq
        %v328 = vshrl.u32 %v327, 7
        %v329 = vsub.s32 0, %v328
        %v330 = vrot.slane %v325, %v329
        %v331 = vlaneseq
        %v332 = vshrl.u32 %v331, 7
        %v333 = vsub.s32 1, %v332
        %v334 = vrot.slane %v325, %v333
        %337 = vmatprep.subr.mxu0 %v292
        %338 = vmatpush1.msra.mxu0 %v291
        %339 = vmatprep.subr.mxu0 %v290
        %340 = vmatpush1.msra.mxu0 %v289
        %341 = vmatprep.subr.mxu0 %v288
        %342 = vmatpush1.msra.mxu0 %v287
        %343 = vmatprep.subr.mxu0 %v286
        %344 = vmatpush1.msra.mxu0 %v285
        %345 = vmatprep.subr.mxu0 %v284
        %346 = vmatpush1.msra.mxu0 %v283
        %347 = vmatprep.subr.mxu0 %v282
        %348 = vmatpush1.msra.mxu0 %v281
        %349 = vmatprep.subr.mxu0 %v280
        %350 = vmatpush1.msra.mxu0 %v279
        %351 = vmatprep.subr.mxu0 %v278
        %352 = vmatpush1.msra.mxu0 %v277
        %353 = vmatprep.subr.mxu0 %v276
        %354 = vmatpush1.msra.mxu0 %v275
        %355 = vmatprep.subr.mxu0 %v274
        %356 = vmatpush1.msra.mxu0 %v273
        %357 = vmatprep.subr.mxu0 %v272
        %358 = vmatpush1.msra.mxu0 %v271
        %359 = vmatprep.subr.mxu0 %v270
        %360 = vmatpush1.msra.mxu0 %v269
        %361 = vmatprep.subr.mxu0 %v268
        %362 = vmatpush1.msra.mxu0 %v267
        %363 = vmatprep.subr.mxu0 %v266
        %364 = vmatpush1.msra.mxu0 %v265
        %365 = vmatprep.subr.mxu0 %v264
        %366 = vmatpush1.msra.mxu0 %v263
        %367 = vmatprep.subr.mxu0 %v262
        %368 = vmatpush1.msra.mxu0 %v261
        %369 = vmatprep.subr.mxu0 %v324
        %370 = vmatpush2.msra.mxu0 %v323
        %371 = vmatprep.subr.mxu0 %v322
        %372 = vmatpush2.msra.mxu0 %v321
        %373 = vmatprep.subr.mxu0 %v320
        %374 = vmatpush2.msra.mxu0 %v319
        %375 = vmatprep.subr.mxu0 %v318
        %376 = vmatpush2.msra.mxu0 %v317
        %377 = vmatprep.subr.mxu0 %v316
        %378 = vmatpush2.msra.mxu0 %v315
        %379 = vmatprep.subr.mxu0 %v314
        %380 = vmatpush2.msra.mxu0 %v313
        %381 = vmatprep.subr.mxu0 %v312
        %382 = vmatpush2.msra.mxu0 %v311
        %383 = vmatprep.subr.mxu0 %v310
        %384 = vmatpush2.msra.mxu0 %v309
        %385 = vmatprep.subr.mxu0 %v308
        %386 = vmatpush2.msra.mxu0 %v307
        %387 = vmatprep.subr.mxu0 %v306
        %388 = vmatpush2.msra.mxu0 %v305
        %389 = vmatprep.subr.mxu0 %v304
        %390 = vmatpush2.msra.mxu0 %v303
        %391 = vmatprep.subr.mxu0 %v302
        %392 = vmatpush2.msra.mxu0 %v301
        %393 = vmatprep.subr.mxu0 %v300
        %394 = vmatpush2.msra.mxu0 %v299
        %395 = vmatprep.subr.mxu0 %v298
        %396 = vmatpush2.msra.mxu0 %v297
        %397 = vmatprep.subr.mxu0 %v296
        %398 = vmatpush2.msra.mxu0 %v295
        %399 = vmatprep.subr.mxu0 %v294
        %400 = vmatpush2.msra.mxu0 %v293
        %401 = vmatprep.mubr.f32.mxu0 %v230
        %402 = vmatmul.mubr.f32.gmra.mxu0 %v229
        %v403 = vpop.f32.mrf.mxu0
        %v404 = vadd.f32 %v330, %v403
        %v405 = vpop.f32.mrf.mxu0
        %v406 = vadd.f32 %v334, %v405
        %407 = vmatprep.mubr.f32.mxu0 %v232
        %408 = vmatmul.mubr.f32.gmra.mxu0 %v231
        %v409 = vpop.f32.mrf.mxu0
        %v410 = vadd.f32 %v330, %v409
        %v411 = vpop.f32.mrf.mxu0
        %v412 = vadd.f32 %v334, %v411
        %413 = vmatprep.mubr.f32.mxu0 %v234
        %414 = vmatmul.mubr.f32.gmra.mxu0 %v233
        %v415 = vpop.f32.mrf.mxu0
        %v416 = vadd.f32 %v330, %v415
        %v417 = vpop.f32.mrf.mxu0
        %v418 = vadd.f32 %v334, %v417
        %419 = vmatprep.mubr.f32.mxu0 %v236
        %420 = vmatmul.mubr.f32.gmra.mxu0 %v235
        %v421 = vpop.f32.mrf.mxu0
        %v422 = vadd.f32 %v330, %v421
        %v423 = vpop.f32.mrf.mxu0
        %v424 = vadd.f32 %v334, %v423
        %425 = vmatprep.mubr.f32.mxu0 %v238
        %426 = vmatmul.mubr.f32.gmra.mxu0 %v237
        %v427 = vpop.f32.mrf.mxu0
        %v428 = vadd.f32 %v330, %v427
        %v429 = vpop.f32.mrf.mxu0
        %v430 = vadd.f32 %v334, %v429
        %431 = vmatprep.mubr.f32.mxu0 %v240
        %432 = vmatmul.mubr.f32.gmra.mxu0 %v239
        %v433 = vpop.f32.mrf.mxu0
        %v434 = vadd.f32 %v330, %v433
        %v435 = vpop.f32.mrf.mxu0
        %v436 = vadd.f32 %v334, %v435
        %437 = vmatprep.mubr.f32.mxu0 %v242
        %438 = vmatmul.mubr.f32.gmra.mxu0 %v241
        %v439 = vpop.f32.mrf.mxu0
        %v440 = vadd.f32 %v330, %v439
        %v441 = vpop.f32.mrf.mxu0
        %v442 = vadd.f32 %v334, %v441
        %443 = vmatprep.mubr.f32.mxu0 %v244
        %444 = vmatmul.mubr.f32.gmra.mxu0 %v243
        %v445 = vpop.f32.mrf.mxu0
        %v446 = vadd.f32 %v330, %v445
        %v447 = vpop.f32.mrf.mxu0
        %v448 = vadd.f32 %v334, %v447
        %449 = vmatprep.mubr.f32.mxu0 %v246
        %450 = vmatmul.mubr.f32.gmra.mxu0 %v245
        %v451 = vpop.f32.mrf.mxu0
        %v452 = vadd.f32 %v330, %v451
        %v453 = vpop.f32.mrf.mxu0
        %v454 = vadd.f32 %v334, %v453
        %455 = vmatprep.mubr.f32.mxu0 %v248
        %456 = vmatmul.mubr.f32.gmra.mxu0 %v247
        %v457 = vpop.f32.mrf.mxu0
        %v458 = vadd.f32 %v330, %v457
        %v459 = vpop.f32.mrf.mxu0
        %v460 = vadd.f32 %v334, %v459
        %461 = vmatprep.mubr.f32.mxu0 %v250
        %462 = vmatmul.mubr.f32.gmra.mxu0 %v249
        %v463 = vpop.f32.mrf.mxu0
        %v464 = vadd.f32 %v330, %v463
        %v465 = vpop.f32.mrf.mxu0
        %v466 = vadd.f32 %v334, %v465
        %467 = vmatprep.mubr.f32.mxu0 %v252
        %468 = vmatmul.mubr.f32.gmra.mxu0 %v251
        %v469 = vpop.f32.mrf.mxu0
        %v470 = vadd.f32 %v330, %v469
        %v471 = vpop.f32.mrf.mxu0
        %v472 = vadd.f32 %v334, %v471
        %473 = vmatprep.mubr.f32.mxu0 %v254
        %474 = vmatmul.mubr.f32.gmra.mxu0 %v253
        %v475 = vpop.f32.mrf.mxu0
        %v476 = vadd.f32 %v330, %v475
        %v477 = vpop.f32.mrf.mxu0
        %v478 = vadd.f32 %v334, %v477
        %479 = vmatprep.mubr.f32.mxu0 %v256
        %480 = vmatmul.mubr.f32.gmra.mxu0 %v255
        %v481 = vpop.f32.mrf.mxu0
        %v482 = vadd.f32 %v330, %v481
        %v483 = vpop.f32.mrf.mxu0
        %v484 = vadd.f32 %v334, %v483
        %485 = vmatprep.mubr.f32.mxu0 %v258
        %486 = vmatmul.mubr.f32.gmra.mxu0 %v257
        %v487 = vpop.f32.mrf.mxu0
        %v488 = vadd.f32 %v330, %v487
        %v489 = vpop.f32.mrf.mxu0
        %v490 = vadd.f32 %v334, %v489
        %491 = vmatprep.mubr.f32.mxu0 %v260
        %492 = vmatmul.mubr.f32.gmra.mxu0 %v259
        %v493 = vpop.f32.mrf.mxu0
        %v494 = vadd.f32 %v330, %v493
        %v495 = vpop.f32.mrf.mxu0
        %v496 = vadd.f32 %v334, %v495
        %497 = vdwg.mxu0
        %v498 = vtanh.pop %v404
        %v499 = vtanh.pop %v410
        %v500 = vtanh.pop %v416
        %v501 = vtanh.pop %v422
        %v502 = vtanh.pop %v428
        %v503 = vtanh.pop %v434
        %v504 = vtanh.pop %v440
        %v505 = vtanh.pop %v446
        %v506 = vtanh.pop %v452
        %v507 = vtanh.pop %v458
        %v508 = vtanh.pop %v464
        %v509 = vtanh.pop %v470
        %v510 = vtanh.pop %v476
        %v511 = vtanh.pop %v482
        %v512 = vtanh.pop %v488
        %v513 = vtanh.pop %v494
        %v514 = vxor.u32 %v406, 2147483648
        %v515 = vxor.u32 %v412, 2147483648
        %v516 = vxor.u32 %v418, 2147483648
        %v517 = vxor.u32 %v424, 2147483648
        %v518 = vxor.u32 %v430, 2147483648
        %v519 = vxor.u32 %v436, 2147483648
        %v520 = vxor.u32 %v442, 2147483648
        %v521 = vxor.u32 %v448, 2147483648
        %v522 = vxor.u32 %v454, 2147483648
        %v523 = vxor.u32 %v460, 2147483648
        %v524 = vxor.u32 %v466, 2147483648
        %v525 = vxor.u32 %v472, 2147483648
        %v526 = vxor.u32 %v478, 2147483648
        %v527 = vxor.u32 %v484, 2147483648
        %v528 = vxor.u32 %v490, 2147483648
        %v529 = vxor.u32 %v496, 2147483648
        %v530 = vmul.f32 %v514, 1.442695
        %v531 = vpow.pop %v530
        %v532 = vmul.f32 %v515, 1.442695
        %v533 = vpow.pop %v532
        %v534 = vmul.f32 %v516, 1.442695
        %v535 = vpow.pop %v534
        %v536 = vmul.f32 %v517, 1.442695
        %v537 = vpow.pop %v536
        %v538 = vmul.f32 %v518, 1.442695
        %v539 = vpow.pop %v538
        %v540 = vmul.f32 %v519, 1.442695
        %v541 = vpow.pop %v540
        %v542 = vmul.f32 %v520, 1.442695
        %v543 = vpow.pop %v542
        %v544 = vmul.f32 %v521, 1.442695
        %v545 = vpow.pop %v544
        %v546 = vmul.f32 %v522, 1.442695
        %v547 = vpow.pop %v546
        %v548 = vmul.f32 %v523, 1.442695
        %v549 = vpow.pop %v548
        %v550 = vmul.f32 %v524, 1.442695
        %v551 = vpow.pop %v550
        %v552 = vmul.f32 %v525, 1.442695
        %v553 = vpow.pop %v552
        %v554 = vmul.f32 %v526, 1.442695
        %v555 = vpow.pop %v554
        %v556 = vmul.f32 %v527, 1.442695
        %v557 = vpow.pop %v556
        %v558 = vmul.f32 %v528, 1.442695
        %v559 = vpow.pop %v558
        %v560 = vmul.f32 %v529, 1.442695
        %v561 = vpow.pop %v560
        %v562 = vadd.f32 %v531, 1.0
        %v563 = vadd.f32 %v533, 1.0
        %v564 = vadd.f32 %v535, 1.0
        %v565 = vadd.f32 %v537, 1.0
        %v566 = vadd.f32 %v539, 1.0
        %v567 = vadd.f32 %v541, 1.0
        %v568 = vadd.f32 %v543, 1.0
        %v569 = vadd.f32 %v545, 1.0
        %v570 = vadd.f32 %v547, 1.0
        %v571 = vadd.f32 %v549, 1.0
        %v572 = vadd.f32 %v551, 1.0
        %v573 = vadd.f32 %v553, 1.0
        %v574 = vadd.f32 %v555, 1.0
        %v575 = vadd.f32 %v557, 1.0
        %v576 = vadd.f32 %v559, 1.0
        %v577 = vadd.f32 %v561, 1.0
        %v578 = vrcp.pop %v562
        %v579 = vmul.f32 1.0, %v578
        %v580 = vrcp.pop %v563
        %v581 = vmul.f32 1.0, %v580
        %v582 = vrcp.pop %v564
        %v583 = vmul.f32 1.0, %v582
        %v584 = vrcp.pop %v565
        %v585 = vmul.f32 1.0, %v584
        %v586 = vrcp.pop %v566
        %v587 = vmul.f32 1.0, %v586
        %v588 = vrcp.pop %v567
        %v589 = vmul.f32 1.0, %v588
        %v590 = vrcp.pop %v568
        %v591 = vmul.f32 1.0, %v590
        %v592 = vrcp.pop %v569
        %v593 = vmul.f32 1.0, %v592
        %v594 = vrcp.pop %v570
        %v595 = vmul.f32 1.0, %v594
        %v596 = vrcp.pop %v571
        %v597 = vmul.f32 1.0, %v596
        %v598 = vrcp.pop %v572
        %v599 = vmul.f32 1.0, %v598
        %v600 = vrcp.pop %v573
        %v601 = vmul.f32 1.0, %v600
        %v602 = vrcp.pop %v574
        %v603 = vmul.f32 1.0, %v602
        %v604 = vrcp.pop %v575
        %v605 = vmul.f32 1.0, %v604
        %v606 = vrcp.pop %v576
        %v607 = vmul.f32 1.0, %v606
        %v608 = vrcp.pop %v577
        %v609 = vmul.f32 1.0, %v608
        %v610 = vmul.f32 %v498, %v579
        %v611 = vmul.f32 %v499, %v581
        %v612 = vmul.f32 %v500, %v583
        %v613 = vmul.f32 %v501, %v585
        %v614 = vmul.f32 %v502, %v587
        %v615 = vmul.f32 %v503, %v589
        %v616 = vmul.f32 %v504, %v591
        %v617 = vmul.f32 %v505, %v593
        %v618 = vmul.f32 %v506, %v595
        %v619 = vmul.f32 %v507, %v597
        %v620 = vmul.f32 %v508, %v599
        %v621 = vmul.f32 %v509, %v601
        %v622 = vmul.f32 %v510, %v603
        %v623 = vmul.f32 %v511, %v605
        %v624 = vmul.f32 %v512, %v607
        %v625 = vmul.f32 %v513, %v609
        %v626 = vld [vmem:[%s3] sm:$0x1]
        %v627 = vld [vmem:[#allocation2] sm:$0x1]
        %629 = vset.pattern.permute.xlu0 0
        %630 = vperm.xlu0 %629, %v627
        %v631 = vpop.permute.xlu0 %630
        %v633 = vlaneseq
        %v634 = vshrl.u32 %v633, 7
        %v635 = vsub.s32 0, %v634
        %v636 = vrot.slane %v631, %v635
        %637 = vmatprep.subr.mxu0 0.0
        %638 = vmatpush1.xpose.msra.mxu0 %v625
        %639 = vmatprep.subr.mxu0 0.0
        %640 = vmatpush1.xpose.msra.mxu0 %v624
        %641 = vmatprep.subr.mxu0 0.0
        %642 = vmatpush1.xpose.msra.mxu0 %v623
        %643 = vmatprep.subr.mxu0 0.0
        %644 = vmatpush1.xpose.msra.mxu0 %v622
        %645 = vmatprep.subr.mxu0 0.0
        %646 = vmatpush1.xpose.msra.mxu0 %v621
        %647 = vmatprep.subr.mxu0 0.0
        %648 = vmatpush1.xpose.msra.mxu0 %v620
        %649 = vmatprep.subr.mxu0 0.0
        %650 = vmatpush1.xpose.msra.mxu0 %v619
        %651 = vmatprep.subr.mxu0 0.0
        %652 = vmatpush1.xpose.msra.mxu0 %v618
        %653 = vmatprep.subr.mxu0 0.0
        %654 = vmatpush1.xpose.msra.mxu0 %v617
        %655 = vmatprep.subr.mxu0 0.0
        %656 = vmatpush1.xpose.msra.mxu0 %v616
        %657 = vmatprep.subr.mxu0 0.0
        %658 = vmatpush1.xpose.msra.mxu0 %v615
        %659 = vmatprep.subr.mxu0 0.0
        %660 = vmatpush1.xpose.msra.mxu0 %v614
        %661 = vmatprep.subr.mxu0 0.0
        %662 = vmatpush1.xpose.msra.mxu0 %v613
        %663 = vmatprep.subr.mxu0 0.0
        %664 = vmatpush1.xpose.msra.mxu0 %v612
        %665 = vmatprep.subr.mxu0 0.0
        %666 = vmatpush1.xpose.msra.mxu0 %v611
        %667 = vmatprep.subr.mxu0 0.0
        %668 = vmatpush1.xpose.msra.mxu0 %v610
        %669 = vmatprep.subr.mxu0 0.0
        %670 = vmatpush2.xpose.msra.mxu0 0.0
        %671 = vmatprep.subr.mxu0 0.0
        %672 = vmatpush2.xpose.msra.mxu0 0.0
        %673 = vmatprep.subr.mxu0 0.0
        %674 = vmatpush2.xpose.msra.mxu0 0.0
        %675 = vmatprep.subr.mxu0 0.0
        %676 = vmatpush2.xpose.msra.mxu0 0.0
        %677 = vmatprep.subr.mxu0 0.0
        %678 = vmatpush2.xpose.msra.mxu0 0.0
        %679 = vmatprep.subr.mxu0 0.0
        %680 = vmatpush2.xpose.msra.mxu0 0.0
        %681 = vmatprep.subr.mxu0 0.0
        %682 = vmatpush2.xpose.msra.mxu0 0.0
        %683 = vmatprep.subr.mxu0 0.0
        %684 = vmatpush2.xpose.msra.mxu0 0.0
        %685 = vmatprep.subr.mxu0 0.0
        %686 = vmatpush2.xpose.msra.mxu0 0.0
        %687 = vmatprep.subr.mxu0 0.0
        %688 = vmatpush2.xpose.msra.mxu0 0.0
        %689 = vmatprep.subr.mxu0 0.0
        %690 = vmatpush2.xpose.msra.mxu0 0.0
        %691 = vmatprep.subr.mxu0 0.0
        %692 = vmatpush2.xpose.msra.mxu0 0.0
        %693 = vmatprep.subr.mxu0 0.0
        %694 = vmatpush2.xpose.msra.mxu0 0.0
        %695 = vmatprep.subr.mxu0 0.0
        %696 = vmatpush2.xpose.msra.mxu0 0.0
        %697 = vmatprep.subr.mxu0 0.0
        %698 = vmatpush2.xpose.msra.mxu0 0.0
        %699 = vmatprep.subr.mxu0 0.0
        %700 = vmatpush2.xpose.msra.mxu0 0.0
        %701 = vmatprep.mubr.f32.mxu0 0.0
        %702 = vmatmul.mubr.f32.gmra.mxu0 %v626
        %v703 = vpop.f32.mrf.mxu0
        %v704 = vadd.f32 %v636, %v703
        %v705 = vpop.f32.mrf.mxu0
        %706 = vdwg.mxu0
        %707 = vst [vmem:[%s221] sm:$0x1] %v704
        %s708 = sand.u32 %s139, 1
        %s709 = scalar_lea.sflag [#allocation4], %s708
        %s710 = sand.u32 %s139, 1
        %s711 = scalar_lea.vmem [#allocation3], %s710
        // Predicated region
        $region41: #{attn_net_gated.1} parent=39 // pred_check
          %p712 = pneg %p149
        $region42: #{attn_net_gated.1} parent=39 // pred_check_branch
          %714 = sbr.rel (%p712) target = $region44
        $region43: #{attn_net_gated.1} parent=39 // pred_region
          %s716 = ssub.s32 16, 16
          %717 = vsyncadd %s709, %s716
          %s718 = smul.addr %s21, 16
          %s719 = scalar_lea.hbm %s5, %s718
          %s721 = sshll.u32 %s711, 4
          %s722 = int_to_ptr.vmem [resolvable:$true] %s721
          %724 = dma.vmem_to_hbm [thread:$0]  %s722, 16, %s719, %s709
        $region44: #{attn_net_gated.1} parent=39 // pred_fallthru
          _
      $region40: #{attn_net_gated.1} parent=5 // pred_fallthru
        _
      %p725 = scmp.le.s32.totalorder 2, %s16
      // Predicated region
      $region45: #{attn_net_gated.1} parent=5 // pred_check
        %p726 = pneg %p725
      $region46: #{attn_net_gated.1} parent=5 // pred_check_branch
        %728 = sbr.rel (%p726) target = $region48
      $region47: #{attn_net_gated.1} parent=5 // pred_region
        %s729 = ssub.s32 %s16, 2
        // Predicated region
        $region49: #{attn_net_gated.1} parent=47 // pred_check
          %p730 = pneg %p155
        $region50: #{attn_net_gated.1} parent=47 // pred_check_branch
          %732 = sbr.rel (%p730) target = $region52
        $region51: #{attn_net_gated.1} parent=47 // pred_region
          %s733 = sand.u32 %s140, 1
          %s734 = scalar_lea.sflag [#allocation4], %s733
          %s735 = sand.u32 %s140, 1
          %s736 = scalar_lea.vmem [#allocation3], %s735
          %737 = dma.done %s734, 16
        $region52: #{attn_net_gated.1} parent=47 // pred_fallthru
          _
      $region48: #{attn_net_gated.1} parent=5 // pred_fallthru
        _
    $region6: #{attn_net_gated.1} parent=1 // loop_footer
      %s20 = sadd.s32 1, %s16
    $region7: #{attn_net_gated.1} parent=1 // loop_footer_branch
      %15 = sbr.rel target = $region3
    $region8: #{attn_net_gated.1} parent=1 // loop_exit
      _
    %738 = vsyncpa [#allocation4], 1
    %s739 = scalar_lea.sflag [#allocation4], 1
    %740 = vsyncpa %s739, 1

</llo_original>
